<compile_context>
chip_gen: v7x
topology: tpu7x:2x2x1
jax: 0.10.0
libtpu: 0.0.40
codegen_flags: <defaults>
</compile_context>

<pallas_src>
import functools

import jax
import jax.numpy as jnp
from jax.experimental import pallas as pl
from jax.experimental.pallas import tpu as pltpu


def _round_up(x, m):
    return (x + m - 1) // m * m


def seq_attn_kernel(x_ref, y_ref, amask_ref, w_ref, b_ref, o_ref, yproj_ref):
    """One (batch_tile, l1_tile) block of the forward pass.

    x_ref     : (Bt, tL1, Hp)   bf16
    y_ref     : (Bt, L2p, Hp)   bf16   (resident across the L1-tile axis)
    amask_ref : (Bt, 1,  L2p)   f32    additive mask (0 valid, -1e30 pad)
    w_ref     : (Hp, Hp)        bf16   pre-transposed Linear weight (in, out)
    b_ref     : (1, Hp)         f32    Linear bias
    o_ref     : (Bt, tL1, Hp)   f32
    yproj_ref : (Bt, L2p, Hp)   bf16   VMEM scratch: cached relu(y @ W + b)
    """
    Bt, tL1, Hp = x_ref.shape
    _, L2p, _ = y_ref.shape

    w = w_ref[...]          # (Hp, Hp) bf16, already (in, out): no transpose
    b = b_ref[...]          # (1, Hp) f32

    # ---- y projection: compute once per batch tile, cache in VMEM scratch.
    @pl.when(pl.program_id(1) == 0)
    def _():
        y2d = y_ref[...].reshape(Bt * L2p, Hp)          # fold batch into M
        yp = jnp.dot(y2d, w, preferred_element_type=jnp.float32) + b
        yp = jnp.maximum(yp, 0.0)
        yproj_ref[...] = yp.reshape(Bt, L2p, Hp).astype(jnp.bfloat16)

    # ---- x projection (batch folded into the matmul M dimension).
    x2d = x_ref[...].reshape(Bt * tL1, Hp)
    xp = jnp.dot(x2d, w, preferred_element_type=jnp.float32) + b
    xp = jnp.maximum(xp, 0.0)
    xp = xp.reshape(Bt, tL1, Hp).astype(jnp.bfloat16)

    # ---- attention scores: contract last dims directly (no XLU transpose).
    scores = jnp.einsum("bqh,bkh->bqk", xp, yproj_ref[...],
                        preferred_element_type=jnp.float32)   # (Bt, tL1, L2p)

    # ---- additive mask (0 valid / -1e30 pad), broadcast over query rows.
    scores = scores + amask_ref[...]

    # ---- softmax over L2 in f32; reciprocal on the EUP.
    mx = jnp.max(scores, axis=-1, keepdims=True)
    p = jnp.exp(scores - mx)
    denom = jnp.sum(p, axis=-1, keepdims=True)
    alpha = p * pl.reciprocal(denom, approx=True)

    # ---- matched_seq = alpha @ y   (bf16 MXU inputs, f32 accumulate)
    out = jnp.einsum("bqk,bkh->bqh", alpha.astype(jnp.bfloat16), y_ref[...],
                     preferred_element_type=jnp.float32)
    o_ref[...] = out.astype(o_ref.dtype)


@functools.partial(jax.jit, static_argnames=("batch_tile", "l1_tile"))
def seq_attn_match(x, y, y_mask, w, b, *, batch_tile=8, l1_tile=256):
    """x: (B,L1,H), y: (B,L2,H), y_mask: (B,L2) (1=pad), w: (H,H) Linear weight
    in PyTorch (out,in) layout, b: (H,). Returns (B,L1,H) float32."""
    B, L1, H = x.shape
    _, L2, _ = y.shape

    # ---- TPU-friendly padded shapes --------------------------------------
    Hp = _round_up(H, 128)                      # lane dim -> dense vst / vreg
    L2p = _round_up(L2, 8)                      # sublane alignment
    Bt = min(batch_tile, B)                     # batch elements per grid step
    Bp = _round_up(B, Bt)
    tL1 = min(_round_up(l1_tile, 8), _round_up(L1, 8))
    L1p = _round_up(L1, tL1)
    nb, nl1 = Bp // Bt, L1p // tL1

    f32 = jnp.float32
    bf16 = jnp.bfloat16

    # Zero-pad activations; cast matmul operands to bf16 in the wrapper
    # (halves DMA bytes; accumulation stays f32 inside the kernel).
    x_p = jnp.zeros((Bp, L1p, Hp), bf16).at[:B, :L1, :H].set(x.astype(bf16))
    y_p = jnp.zeros((Bp, L2p, Hp), bf16).at[:B, :L2, :H].set(y.astype(bf16))

    # Additive mask: 0.0 valid, -1e30 pad.  Padded L2 positions / padded batch
    # rows are fully masked so they never leak into softmax or alpha @ y.
    NEG = f32(-1e30)
    mask_f = y_mask.astype(f32)
    amask = jnp.full((Bp, 1, L2p), NEG, f32)
    amask = amask.at[:B, 0, :L2].set(jnp.where(mask_f > 0.5, NEG, f32(0.0)))

    # Pre-transpose the Linear weight to (H_in, H_out) so the kernel never
    # transposes; zero-pad weight and bias (padded out-channels stay 0).
    wt = jnp.zeros((Hp, Hp), bf16).at[:H, :H].set(w.T.astype(bf16))
    bp = jnp.zeros((1, Hp), f32).at[0, :H].set(b.astype(f32))

    out = pl.pallas_call(
        seq_attn_kernel,
        out_shape=jax.ShapeDtypeStruct((Bp, L1p, Hp), f32),
        grid=(nb, nl1),
        in_specs=[
            pl.BlockSpec((Bt, tL1, Hp), lambda i, j: (i, j, 0)),   # x tile
            pl.BlockSpec((Bt, L2p, Hp), lambda i, j: (i, 0, 0)),   # y (resident over j)
            pl.BlockSpec((Bt, 1, L2p), lambda i, j: (i, 0, 0)),    # additive mask
            pl.BlockSpec((Hp, Hp), lambda i, j: (0, 0)),           # W^T
            pl.BlockSpec((1, Hp), lambda i, j: (0, 0)),            # bias
        ],
        out_specs=pl.BlockSpec((Bt, tL1, Hp), lambda i, j: (i, j, 0)),
        scratch_shapes=[pltpu.VMEM((Bt, L2p, Hp), bf16)],          # cached y_proj
        compiler_params=pltpu.CompilerParams(
            # L1-tile axis must be "arbitrary": the y_proj cache is reused
            # sequentially across it on one core.
            dimension_semantics=("parallel", "arbitrary")),
    )(x_p, y_p, amask, wt, bp)

    return out[:B, :L1, :H]


def seq_attn_match_ref(x, y, y_mask, w, b):
    """Pure-JAX f32 reference mirroring the PyTorch forward."""
    x_proj = jax.nn.relu(jnp.einsum("blh,oh->blo", x, w) + b)
    y_proj = jax.nn.relu(jnp.einsum("blh,oh->blo", y, w) + b)
    scores = jnp.einsum("bqh,bkh->bqk", x_proj, y_proj)
    scores = jnp.where(y_mask[:, None, :] > 0.5, -jnp.inf, scores)
    alpha = jax.nn.softmax(scores, axis=-1)
    return jnp.einsum("bqk,bkh->bqh", alpha, y)


if __name__ == "__main__":
    B, L1, L2, H = 2, 8, 8, 32

    key = jax.random.PRNGKey(0)
    kx, ky, kw, kb = jax.random.split(key, 4)

    x = jax.random.normal(kx, (B, L1, H), dtype=jnp.float32)
    y = jax.random.normal(ky, (B, L2, H), dtype=jnp.float32)

    # Deterministic nn.Linear(H, H)-shaped params (PyTorch (out,in) layout).
    bound = 1.0 / jnp.sqrt(H)
    w = jax.random.uniform(kw, (H, H), minval=-bound, maxval=bound,
                           dtype=jnp.float32)
    b = jax.random.uniform(kb, (H,), minval=-bound, maxval=bound,
                           dtype=jnp.float32)

    # Mask: last 2 positions of each y-sequence are padding (1 = pad).
    y_mask = jnp.zeros((B, L2), dtype=jnp.float32)
    y_mask = y_mask.at[:, L2 - 2:].set(1.0)

    out = seq_attn_match(x, y, y_mask, w, b)
    out = jax.block_until_ready(out)

    ref = seq_attn_match_ref(x, y, y_mask, w, b)
    assert out.shape == (B, L1, H)
    err = float(jnp.max(jnp.abs(out - ref)))
    # bf16 MXU operands (f32 accumulation) -> bf16-appropriate tolerance.
    assert jnp.allclose(out, ref, atol=5e-2, rtol=5e-2), f"mismatch vs reference (max abs err {err})"

    print("KERNEL_OK")
</pallas_src>

<mosaic_0001>
module attributes {stable_mosaic.version = 11 : i64} {
  func.func @seq_attn_kernel(%arg0: i32, %arg1: i32, %arg2: memref<2x8x128xbf16, #tpu.memory_space<vmem>>, %arg3: memref<2x8x128xbf16, #tpu.memory_space<vmem>>, %arg4: memref<2x1x8xf32, #tpu.memory_space<vmem>>, %arg5: memref<128x128xbf16, #tpu.memory_space<vmem>>, %arg6: memref<1x128xf32, #tpu.memory_space<vmem>>, %arg7: memref<2x8x128xf32, #tpu.memory_space<vmem>>, %arg8: memref<2x8x128xbf16, #tpu.memory_space<vmem>>) attributes {dimension_semantics = [#tpu.dimension_semantics<parallel>, #tpu.dimension_semantics<arbitrary>], iteration_bounds = array<i64: 1, 1>, scalar_prefetch = 0 : i64, scratch_operands = 1 : i64, tpu.core_type = #tpu.core_type<tc>, window_params = [{transform_indices = @transform_0, window_bounds = array<i64: 2, 8, 128>}, {transform_indices = @transform_1, window_bounds = array<i64: 2, 8, 128>}, {transform_indices = @transform_2, window_bounds = array<i64: 2, 1, 8>}, {pipeline_mode = #tpu.pipeline_mode<synchronous>, transform_indices = @transform_3, window_bounds = array<i64: 128, 128>}, {pipeline_mode = #tpu.pipeline_mode<synchronous>, transform_indices = @transform_4, window_bounds = array<i64: 1, 128>}, {transform_indices = @transform_5, window_bounds = array<i64: 2, 8, 128>}]} {
    %c0 = arith.constant 0 : index
    %c0_0 = arith.constant 0 : index
    %0 = vector.load %arg5[%c0, %c0_0] : memref<128x128xbf16, #tpu.memory_space<vmem>>, vector<128x128xbf16>
    %c0_1 = arith.constant 0 : index
    %c0_2 = arith.constant 0 : index
    %1 = vector.load %arg6[%c0_1, %c0_2] : memref<1x128xf32, #tpu.memory_space<vmem>>, vector<1x128xf32>
    %c0_i32 = arith.constant 0 : i32
    %2 = arith.cmpi eq, %arg1, %c0_i32 : i32
    %3 = arith.extui %2 : i1 to i32
    %c0_i32_3 = arith.constant 0 : i32
    %4 = arith.cmpi ne, %3, %c0_i32_3 : i32
    scf.if %4 {
      %c0_24 = arith.constant 0 : index
      %c0_25 = arith.constant 0 : index
      %c0_26 = arith.constant 0 : index
      %33 = vector.load %arg3[%c0_24, %c0_25, %c0_26] : memref<2x8x128xbf16, #tpu.memory_space<vmem>>, vector<2x8x128xbf16>
      %34 = vector.shape_cast %33 : vector<2x8x128xbf16> to vector<16x128xbf16>
      %cst_27 = arith.constant dense<0.000000e+00> : vector<16x128xf32>
      %35 = tpu.matmul %34, %0, %cst_27 {dimension_numbers = #tpu.dot_dimension_numbers<[1], [0], [0], [1], [0, 0, 1, 1], [], []>} : vector<16x128xbf16>, vector<128x128xbf16>, vector<16x128xf32> -> vector<16x128xf32>
      %36 = vector.broadcast %1 : vector<1x128xf32> to vector<16x128xf32>
      %37 = arith.addf %35, %36 : vector<16x128xf32>
      %cst_28 = arith.constant 0.000000e+00 : f32
      %38 = vector.broadcast %cst_28 : f32 to vector<16x128xf32>
      %39 = arith.maximumf %37, %38 : vector<16x128xf32>
      %40 = vector.shape_cast %39 : vector<16x128xf32> to vector<2x8x128xf32>
      %41 = arith.truncf %40 : vector<2x8x128xf32> to vector<2x8x128xbf16>
      %c0_29 = arith.constant 0 : index
      %c0_30 = arith.constant 0 : index
      %c0_31 = arith.constant 0 : index
      %42 = vector.load %arg8[%c0_29, %c0_30, %c0_31] : memref<2x8x128xbf16, #tpu.memory_space<vmem>>, vector<2x8x128xbf16>
      tpu.vector_store %arg8[%c0_29, %c0_30, %c0_31], %41 {strides = array<i32>} : memref<2x8x128xbf16, #tpu.memory_space<vmem>>, vector<2x8x128xbf16>,
    } else {
    }
    %c0_4 = arith.constant 0 : index
    %c0_5 = arith.constant 0 : index
    %c0_6 = arith.constant 0 : index
    %5 = vector.load %arg2[%c0_4, %c0_5, %c0_6] : memref<2x8x128xbf16, #tpu.memory_space<vmem>>, vector<2x8x128xbf16>
    %6 = vector.shape_cast %5 : vector<2x8x128xbf16> to vector<16x128xbf16>
    %cst = arith.constant dense<0.000000e+00> : vector<16x128xf32>
    %7 = tpu.matmul %6, %0, %cst {dimension_numbers = #tpu.dot_dimension_numbers<[1], [0], [0], [1], [0, 0, 1, 1], [], []>} : vector<16x128xbf16>, vector<128x128xbf16>, vector<16x128xf32> -> vector<16x128xf32>
    %8 = vector.broadcast %1 : vector<1x128xf32> to vector<16x128xf32>
    %9 = arith.addf %7, %8 : vector<16x128xf32>
    %cst_7 = arith.constant 0.000000e+00 : f32
    %10 = vector.broadcast %cst_7 : f32 to vector<16x128xf32>
    %11 = arith.maximumf %9, %10 : vector<16x128xf32>
    %12 = vector.shape_cast %11 : vector<16x128xf32> to vector<2x8x128xf32>
    %13 = arith.truncf %12 : vector<2x8x128xf32> to vector<2x8x128xbf16>
    %c0_8 = arith.constant 0 : index
    %c0_9 = arith.constant 0 : index
    %c0_10 = arith.constant 0 : index
    %14 = vector.load %arg8[%c0_8, %c0_9, %c0_10] : memref<2x8x128xbf16, #tpu.memory_space<vmem>>, vector<2x8x128xbf16>
    "tpu.trace_start"() <{level = 10 : i32, message = "bqh,bkh->bqk"}> : () -> ()
    %cst_11 = arith.constant dense<0.000000e+00> : vector<2x8x8xf32>
    %15 = tpu.matmul %13, %14, %cst_11 {dimension_numbers = #tpu.dot_dimension_numbers<[2], [2], [1], [1], [0, 0, 0, 1, 1, 1], [0], [0]>} : vector<2x8x128xbf16>, vector<2x8x128xbf16>, vector<2x8x8xf32> -> vector<2x8x8xf32>
    "tpu.trace_stop"() : () -> ()
    %c0_12 = arith.constant 0 : index
    %c0_13 = arith.constant 0 : index
    %c0_14 = arith.constant 0 : index
    %16 = vector.load %arg4[%c0_12, %c0_13, %c0_14] : memref<2x1x8xf32, #tpu.memory_space<vmem>>, vector<2x1x8xf32>
    %17 = vector.broadcast %16 : vector<2x1x8xf32> to vector<2x8x8xf32>
    %18 = arith.addf %15, %17 : vector<2x8x8xf32>
    %cst_15 = arith.constant dense<0xFF800000> : vector<2x8xf32>
    %19 = vector.multi_reduction <maximumf>, %18, %cst_15 [2] : vector<2x8x8xf32> to vector<2x8xf32>
    %20 = vector.shape_cast %19 : vector<2x8xf32> to vector<2x8x1xf32>
    %21 = vector.broadcast %20 : vector<2x8x1xf32> to vector<2x8x8xf32>
    %22 = arith.subf %18, %21 : vector<2x8x8xf32>
    %23 = math.exp %22 : vector<2x8x8xf32>
    %cst_16 = arith.constant dense<0.000000e+00> : vector<2x8xf32>
    %24 = vector.multi_reduction <add>, %23, %cst_16 [2] : vector<2x8x8xf32> to vector<2x8xf32>
    %25 = vector.shape_cast %24 : vector<2x8xf32> to vector<2x8x1xf32>
    %26 = tpu.reciprocal %25 {approx = true} : vector<2x8x1xf32> -> vector<2x8x1xf32>
    %27 = vector.broadcast %26 : vector<2x8x1xf32> to vector<2x8x8xf32>
    %28 = arith.mulf %23, %27 : vector<2x8x8xf32>
    %29 = arith.truncf %28 : vector<2x8x8xf32> to vector<2x8x8xbf16>
    %c0_17 = arith.constant 0 : index
    %c0_18 = arith.constant 0 : index
    %c0_19 = arith.constant 0 : index
    %30 = vector.load %arg3[%c0_17, %c0_18, %c0_19] : memref<2x8x128xbf16, #tpu.memory_space<vmem>>, vector<2x8x128xbf16>
    "tpu.trace_start"() <{level = 10 : i32, message = "bqk,bkh->bqh"}> : () -> ()
    %cst_20 = arith.constant dense<0.000000e+00> : vector<2x8x128xf32>
    %31 = tpu.matmul %29, %30, %cst_20 {dimension_numbers = #tpu.dot_dimension_numbers<[2], [1], [1], [2], [0, 0, 0, 1, 1, 2], [0], [0]>} : vector<2x8x8xbf16>, vector<2x8x128xbf16>, vector<2x8x128xf32> -> vector<2x8x128xf32>
    "tpu.trace_stop"() : () -> ()
    %c0_21 = arith.constant 0 : index
    %c0_22 = arith.constant 0 : index
    %c0_23 = arith.constant 0 : index
    %32 = vector.load %arg7[%c0_21, %c0_22, %c0_23] : memref<2x8x128xf32, #tpu.memory_space<vmem>>, vector<2x8x128xf32>
    tpu.vector_store %arg7[%c0_21, %c0_22, %c0_23], %31 {strides = array<i32>} : memref<2x8x128xf32, #tpu.memory_space<vmem>>, vector<2x8x128xf32>,
    return
  }
  func.func @transform_0(%arg0: i32, %arg1: i32) -> (i32, i32, i32) {
    %c0_i32 = arith.constant 0 : i32
    %c0_i32_0 = arith.constant 0 : i32
    return %arg0, %arg1, %c0_i32 : i32, i32, i32
  }
  func.func @transform_1(%arg0: i32, %arg1: i32) -> (i32, i32, i32) {
    %c0_i32 = arith.constant 0 : i32
    %c0_i32_0 = arith.constant 0 : i32
    %c0_i32_1 = arith.constant 0 : i32
    return %arg0, %c0_i32, %c0_i32_0 : i32, i32, i32
  }
  func.func @transform_2(%arg0: i32, %arg1: i32) -> (i32, i32, i32) {
    %c0_i32 = arith.constant 0 : i32
    %c0_i32_0 = arith.constant 0 : i32
    %c0_i32_1 = arith.constant 0 : i32
    return %arg0, %c0_i32, %c0_i32_0 : i32, i32, i32
  }
  func.func @transform_3(%arg0: i32, %arg1: i32) -> (i32, i32) {
    %c0_i32 = arith.constant 0 : i32
    %c0_i32_0 = arith.constant 0 : i32
    %c0_i32_1 = arith.constant 0 : i32
    return %c0_i32, %c0_i32_0 : i32, i32
  }
  func.func @transform_4(%arg0: i32, %arg1: i32) -> (i32, i32) {
    %c0_i32 = arith.constant 0 : i32
    %c0_i32_0 = arith.constant 0 : i32
    %c0_i32_1 = arith.constant 0 : i32
    return %c0_i32, %c0_i32_0 : i32, i32
  }
  func.func @transform_5(%arg0: i32, %arg1: i32) -> (i32, i32, i32) {
    %c0_i32 = arith.constant 0 : i32
    %c0_i32_0 = arith.constant 0 : i32
    return %arg0, %arg1, %c0_i32 : i32, i32, i32
  }
}

</mosaic_0001>

<llo_original>
// kernel: seq_attn_match.1
$region0: #{seq_attn_match.1}
  #allocation0 [shape = 'u32[]', space=smem, size = 0x4, offset = 0x4, fixed_abs, tag = 'smem constant byte address 0x4 - core index']
  #allocation1 [shape = 'u32[144,128]{1,0:T(1,128)}', space=vmem, size = 0x12000, scoped, tag = 'internal scratch']
  #allocation2 [shape = 'bf16[2,8,128]{2,1,0:T(8,128)(2,1)}', space=vmem, size = 0x1000, scoped, tag = 'scratch operand']
  %s0 = inlined_call_operand.vmem [shape: bf16[2,8,128], index: 0, kind: input, shape index: {}]
  %s1 = inlined_call_operand.vmem [shape: bf16[2,8,128], index: 1, kind: input, shape index: {}]
  %s2 = inlined_call_operand.vmem [shape: f32[2,1,8], index: 2, kind: input, shape index: {}]
  %s3 = inlined_call_operand.vmem [shape: bf16[128,128], index: 3, kind: input, shape index: {}]
  %s4 = inlined_call_operand.vmem [shape: f32[1,128], index: 4, kind: input, shape index: {}]
  %s5 = inlined_call_operand.hbm [shape: f32[2,8,128], index: 5, kind: output, shape index: {}]
  %s6 = sld [smem:[#allocation0]]
  $region34: #{seq_attn_match.1} parent=0
    _
  %s8 = ssub.s32 1, %s6
  %s9 = scalar_select 0, %s8, %s6
  $region1: #{seq_attn_match.1} parent=0
    #allocation3 [shape = 'u8[8192]{0}', space=vmem, size = 0x2000, scoped, tag = 'output window, operand 0, single buffered']
    #allocation4 [shape = 's32[1]{0}', space=sflag, size = 0x4, scoped, tag = 'scoped memory for seq_attn_match.1']
    %10 = vsyncpa [#allocation4], 0
    // Predicated region
    $region2: #{seq_attn_match.1} parent=1 // pred_check
      _
    $region3: #{seq_attn_match.1} parent=1 // pred_check_branch
      %12 = sbr.rel (0) target = $region5
    $region4: #{seq_attn_match.1} parent=1 // pred_region
      _
    $region5: #{seq_attn_match.1} parent=1 // pred_fallthru
      _
    // Predicated region
    $region6: #{seq_attn_match.1} parent=1 // pred_check
      _
    $region7: #{seq_attn_match.1} parent=1 // pred_check_branch
      %14 = sbr.rel (0) target = $region9
    $region8: #{seq_attn_match.1} parent=1 // pred_region
      _
    $region9: #{seq_attn_match.1} parent=1 // pred_fallthru
      _
    // Predicated region
    $region10: #{seq_attn_match.1} parent=1 // pred_check
      _
    $region11: #{seq_attn_match.1} parent=1 // pred_check_branch
      %16 = sbr.rel (0) target = $region13
    $region12: #{seq_attn_match.1} parent=1 // pred_region
      _
    $region13: #{seq_attn_match.1} parent=1 // pred_fallthru
      _
    // Predicated region
    $region14: #{seq_attn_match.1} parent=1 // pred_check
      _
    $region15: #{seq_attn_match.1} parent=1 // pred_check_branch
      %18 = sbr.rel (0) target = $region17
    $region16: #{seq_attn_match.1} parent=1 // pred_region
      _
    $region17: #{seq_attn_match.1} parent=1 // pred_fallthru
      _
    // Predicated region
    $region18: #{seq_attn_match.1} parent=1 // pred_check
      _
    $region19: #{seq_attn_match.1} parent=1 // pred_check_branch
      %20 = sbr.rel (0) target = $region21
    $region20: #{seq_attn_match.1} parent=1 // pred_region
      _
    $region21: #{seq_attn_match.1} parent=1 // pred_fallthru
      _
    %v22 = vld [vmem:[%s3] sm:$0xf]
    %v23 = vld [vmem:[%s3 + $0x4] sm:$0xf]
    %v24 = vld [vmem:[%s3 + $0x8] sm:$0xf]
    %v25 = vld [vmem:[%s3 + $0xc] sm:$0xf]
    %v26 = vld [vmem:[%s3 + $0x10] sm:$0xf]
    %v27 = vld [vmem:[%s3 + $0x14] sm:$0xf]
    %v28 = vld [vmem:[%s3 + $0x18] sm:$0xf]
    %v29 = vld [vmem:[%s3 + $0x1c] sm:$0xf]
    %v30 = vld [vmem:[%s3 + $0x20] sm:$0xf]
    %v31 = vld [vmem:[%s3 + $0x24] sm:$0xf]
    %v32 = vld [vmem:[%s3 + $0x28] sm:$0xf]
    %v33 = vld [vmem:[%s3 + $0x2c] sm:$0xf]
    %v34 = vld [vmem:[%s3 + $0x30] sm:$0xf]
    %v35 = vld [vmem:[%s3 + $0x34] sm:$0xf]
    %v36 = vld [vmem:[%s3 + $0x38] sm:$0xf]
    %v37 = vld [vmem:[%s3 + $0x3c] sm:$0xf]
    %v38 = vld [vmem:[%s4] sm:$0x1]
    %p39 = scmp.eq.s32.totalorder 0, 0
    // Predicated region
    $region22: #{seq_attn_match.1} parent=1 // pred_check
      %p40 = pneg %p39
    $region23: #{seq_attn_match.1} parent=1 // pred_check_branch
      %42 = sbr.rel (%p40) target = $region25
    $region24: #{seq_attn_match.1} parent=1 // pred_region
      %v43 = vld [vmem:[%s1] sm:$0xf]
      %v44 = vld [vmem:[%s1 + $0x4] sm:$0xf]
      %v46 = vlaneseq
      %v47 = vshrl.u32 %v46, 7
      %v48 = vsub.s32 0, %v47
      %v49 = vrot.slane %v38, %v48
      %v53 = vunpack.c.l.b16 %v43
      %v54 = vunpack.c.l.b16 %v44
      %v55 = vpack.c.b16 %v54, %v53
      %v73 = vunpack.c.l.b16 %v22
      %v74 = vunpack.c.l.b16 %v23
      %v75 = vunpack.c.l.b16 %v24
      %v76 = vunpack.c.l.b16 %v25
      %v77 = vunpack.c.l.b16 %v26
      %v78 = vunpack.c.l.b16 %v27
      %v79 = vunpack.c.l.b16 %v28
      %v80 = vunpack.c.l.b16 %v29
      %v81 = vunpack.c.l.b16 %v30
      %v82 = vunpack.c.l.b16 %v31
      %v83 = vunpack.c.l.b16 %v32
      %v84 = vunpack.c.l.b16 %v33
      %v85 = vunpack.c.l.b16 %v34
      %v86 = vunpack.c.l.b16 %v35
      %v87 = vunpack.c.l.b16 %v36
      %v88 = vunpack.c.l.b16 %v37
      %v89 = vpack.c.b16 %v74, %v73
      %v90 = vpack.c.b16 %v76, %v75
      %v91 = vpack.c.b16 %v78, %v77
      %v92 = vpack.c.b16 %v80, %v79
      %v93 = vpack.c.b16 %v82, %v81
      %v94 = vpack.c.b16 %v84, %v83
      %v95 = vpack.c.b16 %v86, %v85
      %v96 = vpack.c.b16 %v88, %v87
      %105 = vmatprep.subr.bf16.mxu0 0
      %106 = vmatpush1.bf16.msra.mxu0 %v89
      %107 = vmatprep.subr.bf16.mxu0 0
      %108 = vmatpush1.bf16.msra.mxu0 %v90
      %109 = vmatprep.subr.bf16.mxu0 0
      %110 = vmatpush1.bf16.msra.mxu0 %v91
      %111 = vmatprep.subr.bf16.mxu0 0
      %112 = vmatpush1.bf16.msra.mxu0 %v92
      %113 = vmatprep.subr.bf16.mxu0 0
      %114 = vmatpush1.bf16.msra.mxu0 %v93
      %115 = vmatprep.subr.bf16.mxu0 0
      %116 = vmatpush1.bf16.msra.mxu0 %v94
      %117 = vmatprep.subr.bf16.mxu0 0
      %118 = vmatpush1.bf16.msra.mxu0 %v95
      %119 = vmatprep.subr.bf16.mxu0 0
      %120 = vmatpush1.bf16.msra.mxu0 %v96
      %121 = vmatprep.subr.bf16.mxu0 0
      %122 = vmatpush1.bf16.msra.mxu0 0
      %123 = vmatprep.subr.bf16.mxu0 0
      %124 = vmatpush1.bf16.msra.mxu0 0
      %125 = vmatprep.subr.bf16.mxu0 0
      %126 = vmatpush1.bf16.msra.mxu0 0
      %127 = vmatprep.subr.bf16.mxu0 0
      %128 = vmatpush1.bf16.msra.mxu0 0
      %129 = vmatprep.subr.bf16.mxu0 0
      %130 = vmatpush1.bf16.msra.mxu0 0
      %131 = vmatprep.subr.bf16.mxu0 0
      %132 = vmatpush1.bf16.msra.mxu0 0
      %133 = vmatprep.subr.bf16.mxu0 0
      %134 = vmatpush1.bf16.msra.mxu0 0
      %135 = vmatprep.subr.bf16.mxu0 0
      %136 = vmatpush1.bf16.msra.mxu0 0
      %137 = vmatprep.mubr.bf16.mxu0 0
      %138 = vmatmul.mubr.bf16.gmra.mrb[0].mxu0 %v55
      %v139 = vpop.f32.mrb[0].mxu0
      %v140 = vadd.f32 %v49, %v139
      %v141 = vpop.f32.mrb[0].mxu0
      %v142 = vpop.f32.mrb[0].mxu0
      %v143 = vadd.f32 %v49, %v142
      %v144 = vpop.f32.mrb[0].mxu0
      %145 = vdwg.mxu0
      %v146 = vmax.f32 %v140, 0.0
      %v147 = vmax.f32 %v143, 0.0
      %v148 = vpack.c.bf16 %v146, %v146
      %v149 = vpack.c.bf16 %v147, %v147
      %150 = vst [vmem:[#allocation2] sm:$0xf] %v148
      %151 = vst [vmem:[#allocation2 + $0x4] sm:$0xf] %v149
    $region25: #{seq_attn_match.1} parent=1 // pred_fallthru
      _
    %v152 = vld [vmem:[%s0] sm:$0xf]
    %v153 = vld [vmem:[%s0 + $0x4] sm:$0xf]
    %v155 = vlaneseq
    %v156 = vshrl.u32 %v155, 7
    %v157 = vsub.s32 0, %v156
    %v158 = vrot.slane %v38, %v157
    %v162 = vunpack.c.l.b16 %v152
    %v163 = vunpack.c.l.b16 %v153
    %v164 = vpack.c.b16 %v163, %v162
    %v182 = vunpack.c.l.b16 %v22
    %v183 = vunpack.c.l.b16 %v23
    %v184 = vunpack.c.l.b16 %v24
    %v185 = vunpack.c.l.b16 %v25
    %v186 = vunpack.c.l.b16 %v26
    %v187 = vunpack.c.l.b16 %v27
    %v188 = vunpack.c.l.b16 %v28
    %v189 = vunpack.c.l.b16 %v29
    %v190 = vunpack.c.l.b16 %v30
    %v191 = vunpack.c.l.b16 %v31
    %v192 = vunpack.c.l.b16 %v32
    %v193 = vunpack.c.l.b16 %v33
    %v194 = vunpack.c.l.b16 %v34
    %v195 = vunpack.c.l.b16 %v35
    %v196 = vunpack.c.l.b16 %v36
    %v197 = vunpack.c.l.b16 %v37
    %v198 = vpack.c.b16 %v183, %v182
    %v199 = vpack.c.b16 %v185, %v184
    %v200 = vpack.c.b16 %v187, %v186
    %v201 = vpack.c.b16 %v189, %v188
    %v202 = vpack.c.b16 %v191, %v190
    %v203 = vpack.c.b16 %v193, %v192
    %v204 = vpack.c.b16 %v195, %v194
    %v205 = vpack.c.b16 %v197, %v196
    %214 = vmatprep.subr.bf16.mxu0 0
    %215 = vmatpush1.bf16.msra.mxu0 %v198
    %216 = vmatprep.subr.bf16.mxu0 0
    %217 = vmatpush1.bf16.msra.mxu0 %v199
    %218 = vmatprep.subr.bf16.mxu0 0
    %219 = vmatpush1.bf16.msra.mxu0 %v200
    %220 = vmatprep.subr.bf16.mxu0 0
    %221 = vmatpush1.bf16.msra.mxu0 %v201
    %222 = vmatprep.subr.bf16.mxu0 0
    %223 = vmatpush1.bf16.msra.mxu0 %v202
    %224 = vmatprep.subr.bf16.mxu0 0
    %225 = vmatpush1.bf16.msra.mxu0 %v203
    %226 = vmatprep.subr.bf16.mxu0 0
    %227 = vmatpush1.bf16.msra.mxu0 %v204
    %228 = vmatprep.subr.bf16.mxu0 0
    %229 = vmatpush1.bf16.msra.mxu0 %v205
    %230 = vmatprep.subr.bf16.mxu0 0
    %231 = vmatpush1.bf16.msra.mxu0 0
    %232 = vmatprep.subr.bf16.mxu0 0
    %233 = vmatpush1.bf16.msra.mxu0 0
    %234 = vmatprep.subr.bf16.mxu0 0
    %235 = vmatpush1.bf16.msra.mxu0 0
    %236 = vmatprep.subr.bf16.mxu0 0
    %237 = vmatpush1.bf16.msra.mxu0 0
    %238 = vmatprep.subr.bf16.mxu0 0
    %239 = vmatpush1.bf16.msra.mxu0 0
    %240 = vmatprep.subr.bf16.mxu0 0
    %241 = vmatpush1.bf16.msra.mxu0 0
    %242 = vmatprep.subr.bf16.mxu0 0
    %243 = vmatpush1.bf16.msra.mxu0 0
    %244 = vmatprep.subr.bf16.mxu0 0
    %245 = vmatpush1.bf16.msra.mxu0 0
    %246 = vmatprep.mubr.bf16.mxu0 0
    %247 = vmatmul.mubr.bf16.gmra.mrb[0].mxu0 %v164
    %v248 = vpop.f32.mrb[0].mxu0
    %v249 = vadd.f32 %v158, %v248
    %v250 = vpop.f32.mrb[0].mxu0
    %v251 = vpop.f32.mrb[0].mxu0
    %v252 = vadd.f32 %v158, %v251
    %v253 = vpop.f32.mrb[0].mxu0
    %254 = vdwg.mxu0
    %v255 = vmax.f32 %v249, 0.0
    %v256 = vmax.f32 %v252, 0.0
    %v257 = vpack.c.bf16 %v255, %v255
    %v258 = vpack.c.bf16 %v256, %v256
    %v259 = vld [vmem:[#allocation2] sm:$0xf]
    %v260 = vld [vmem:[#allocation2 + $0x4] sm:$0xf]
    %v261 = vld [vmem:[%s2] sm:$0x1]
    %v262 = vld [vmem:[%s2 + $0x1] sm:$0x1]
    %v265 = vlaneseq
    %v266 = vshrl.u32 %v265, 7
    %v267 = vsub.s32 0, %v266
    %v268 = vrot.slane %v261, %v267
    %v269 = vlaneseq
    %v270 = vshrl.u32 %v269, 7
    %v271 = vsub.s32 0, %v270
    %v272 = vrot.slane %v262, %v271
    %275 = vmatprep.subr.bf16.mxu0 0
    %276 = vmatpush1.bf16.xpose.msra.mxu0 %v259
    %277 = vmatprep.subr.bf16.mxu0 0
    %278 = vmatpush1.bf16.xpose.msra.mxu0 0
    %279 = vmatprep.subr.bf16.mxu0 0
    %280 = vmatpush1.bf16.xpose.msra.mxu0 0
    %281 = vmatprep.subr.bf16.mxu0 0
    %282 = vmatpush1.bf16.xpose.msra.mxu0 0
    %283 = vmatprep.subr.bf16.mxu0 0
    %284 = vmatpush1.bf16.xpose.msra.mxu0 0
    %285 = vmatprep.subr.bf16.mxu0 0
    %286 = vmatpush1.bf16.xpose.msra.mxu0 0
    %287 = vmatprep.subr.bf16.mxu0 0
    %288 = vmatpush1.bf16.xpose.msra.mxu0 0
    %289 = vmatprep.subr.bf16.mxu0 0
    %290 = vmatpush1.bf16.xpose.msra.mxu0 0
    %291 = vmatprep.subr.bf16.mxu0 0
    %292 = vmatpush1.bf16.xpose.msra.mxu0 0
    %293 = vmatprep.subr.bf16.mxu0 0
    %294 = vmatpush1.bf16.xpose.msra.mxu0 0
    %295 = vmatprep.subr.bf16.mxu0 0
    %296 = vmatpush1.bf16.xpose.msra.mxu0 0
    %297 = vmatprep.subr.bf16.mxu0 0
    %298 = vmatpush1.bf16.xpose.msra.mxu0 0
    %299 = vmatprep.subr.bf16.mxu0 0
    %300 = vmatpush1.bf16.xpose.msra.mxu0 0
    %301 = vmatprep.subr.bf16.mxu0 0
    %302 = vmatpush1.bf16.xpose.msra.mxu0 0
    %303 = vmatprep.subr.bf16.mxu0 0
    %304 = vmatpush1.bf16.xpose.msra.mxu0 0
    %305 = vmatprep.subr.bf16.mxu0 0
    %306 = vmatpush1.bf16.xpose.msra.mxu0 0
    %307 = vmatprep.mubr.bf16.mxu0 0
    %308 = vmatmul.mubr.bf16.gmra.mrb[0].mxu0 %v257
    %v309 = vpop.f32.mrb[0].mxu0
    %v310 = vadd.f32 %v268, %v309
    %v311 = vpop.f32.mrb[0].mxu0
    %v312 = vpop.f32.mrb[0].mxu0
    %v313 = vpop.f32.mrb[0].mxu0
    %314 = vdwg.mxu0
    %315 = vmatprep.subr.bf16.mxu0 0
    %316 = vmatpush1.bf16.xpose.msra.mxu0 %v260
    %317 = vmatprep.subr.bf16.mxu0 0
    %318 = vmatpush1.bf16.xpose.msra.mxu0 0
    %319 = vmatprep.subr.bf16.mxu0 0
    %320 = vmatpush1.bf16.xpose.msra.mxu0 0
    %321 = vmatprep.subr.bf16.mxu0 0
    %322 = vmatpush1.bf16.xpose.msra.mxu0 0
    %323 = vmatprep.subr.bf16.mxu0 0
    %324 = vmatpush1.bf16.xpose.msra.mxu0 0
    %325 = vmatprep.subr.bf16.mxu0 0
    %326 = vmatpush1.bf16.xpose.msra.mxu0 0
    %327 = vmatprep.subr.bf16.mxu0 0
    %328 = vmatpush1.bf16.xpose.msra.mxu0 0
    %329 = vmatprep.subr.bf16.mxu0 0
    %330 = vmatpush1.bf16.xpose.msra.mxu0 0
    %331 = vmatprep.subr.bf16.mxu0 0
    %332 = vmatpush1.bf16.xpose.msra.mxu0 0
    %333 = vmatprep.subr.bf16.mxu0 0
    %334 = vmatpush1.bf16.xpose.msra.mxu0 0
    %335 = vmatprep.subr.bf16.mxu0 0
    %336 = vmatpush1.bf16.xpose.msra.mxu0 0
    %337 = vmatprep.subr.bf16.mxu0 0
    %338 = vmatpush1.bf16.xpose.msra.mxu0 0
    %339 = vmatprep.subr.bf16.mxu0 0
    %340 = vmatpush1.bf16.xpose.msra.mxu0 0
    %341 = vmatprep.subr.bf16.mxu0 0
    %342 = vmatpush1.bf16.xpose.msra.mxu0 0
    %343 = vmatprep.subr.bf16.mxu0 0
    %344 = vmatpush1.bf16.xpose.msra.mxu0 0
    %345 = vmatprep.subr.bf16.mxu0 0
    %346 = vmatpush1.bf16.xpose.msra.mxu0 0
    %347 = vmatprep.mubr.bf16.mxu0 0
    %348 = vmatmul.mubr.bf16.gmra.mrb[0].mxu0 %v258
    %v349 = vpop.f32.mrb[0].mxu0
    %v350 = vadd.f32 %v272, %v349
    %v351 = vpop.f32.mrb[0].mxu0
    %v352 = vpop.f32.mrb[0].mxu0
    %v353 = vpop.f32.mrb[0].mxu0
    %354 = vdwg.mxu0
    %vm355 = vcmask 64512
    %v356 = vsel %vm355, %v310, -inf
    %357 = vmax.xlane.f32.xlu0 %v356
    %v358 = vpop.xlane.xlu0 %357
    %v359 = vsel %vm355, %v350, -inf
    %360 = vmax.xlane.f32.xlu0 %v359
    %v361 = vpop.xlane.xlu0 %360
    %v362 = vsub.f32 %v310, %v358
    %v363 = vsub.f32 %v350, %v361
    %v364 = vmul.f32 %v362, 1.442695
    %v365 = vpow.pop %v364
    %v366 = vmul.f32 %v363, 1.442695
    %v367 = vpow.pop %v366
    %v368 = vsel %vm355, %v365, 0.0
    %369 = vadd.xlane.f32.xlu0 %v368
    %v370 = vpop.xlane.xlu0 %369
    %v371 = vsel %vm355, %v367, 0.0
    %372 = vadd.xlane.f32.xlu0 %v371
    %v373 = vpop.xlane.xlu0 %372
    %v374 = vrcp.pop %v370
    %v375 = vrcp.pop %v373
    %v376 = vmul.f32 %v365, %v374
    %v377 = vmul.f32 %v367, %v375
    %v378 = vpack.c.bf16 %v376, %v376
    %v379 = vpack.c.bf16 %v377, %v377
    %v380 = vld [vmem:[%s1] sm:$0xf]
    %v381 = vld [vmem:[%s1 + $0x4] sm:$0xf]
    %v383 = vsel %vm355, %v378, 0
    %vm385 = vcmask 1043456
    %v387 = vsel %vm385, %v380, 0
    %389 = vmatprep.subr.bf16.mxu0 0
    %390 = vmatpush1.bf16.msra.mxu0 %v387
    %391 = vmatprep.subr.bf16.mxu0 0
    %392 = vmatpush1.bf16.msra.mxu0 0
    %393 = vmatprep.subr.bf16.mxu0 0
    %394 = vmatpush1.bf16.msra.mxu0 0
    %395 = vmatprep.subr.bf16.mxu0 0
    %396 = vmatpush1.bf16.msra.mxu0 0
    %397 = vmatprep.subr.bf16.mxu0 0
    %398 = vmatpush1.bf16.msra.mxu0 0
    %399 = vmatprep.subr.bf16.mxu0 0
    %400 = vmatpush1.bf16.msra.mxu0 0
    %401 = vmatprep.subr.bf16.mxu0 0
    %402 = vmatpush1.bf16.msra.mxu0 0
    %403 = vmatprep.subr.bf16.mxu0 0
    %404 = vmatpush1.bf16.msra.mxu0 0
    %405 = vmatprep.subr.bf16.mxu0 0
    %406 = vmatpush1.bf16.msra.mxu0 0
    %407 = vmatprep.subr.bf16.mxu0 0
    %408 = vmatpush1.bf16.msra.mxu0 0
    %409 = vmatprep.subr.bf16.mxu0 0
    %410 = vmatpush1.bf16.msra.mxu0 0
    %411 = vmatprep.subr.bf16.mxu0 0
    %412 = vmatpush1.bf16.msra.mxu0 0
    %413 = vmatprep.subr.bf16.mxu0 0
    %414 = vmatpush1.bf16.msra.mxu0 0
    %415 = vmatprep.subr.bf16.mxu0 0
    %416 = vmatpush1.bf16.msra.mxu0 0
    %417 = vmatprep.subr.bf16.mxu0 0
    %418 = vmatpush1.bf16.msra.mxu0 0
    %419 = vmatprep.subr.bf16.mxu0 0
    %420 = vmatpush1.bf16.msra.mxu0 0
    %421 = vmatprep.mubr.bf16.mxu0 0
    %422 = vmatmul.mubr.bf16.gmra.mrb[0].mxu0 %v383
    %v423 = vpop.f32.mrb[0].mxu0
    %v424 = vadd.f32 0.0, %v423
    %v425 = vpop.f32.mrb[0].mxu0
    %v426 = vpop.f32.mrb[0].mxu0
    %v427 = vpop.f32.mrb[0].mxu0
    %428 = vdwg.mxu0
    %v430 = vsel %vm355, %v379, 0
    %v433 = vsel %vm385, %v381, 0
    %435 = vmatprep.subr.bf16.mxu0 0
    %436 = vmatpush1.bf16.msra.mxu0 %v433
    %437 = vmatprep.subr.bf16.mxu0 0
    %438 = vmatpush1.bf16.msra.mxu0 0
    %439 = vmatprep.subr.bf16.mxu0 0
    %440 = vmatpush1.bf16.msra.mxu0 0
    %441 = vmatprep.subr.bf16.mxu0 0
    %442 = vmatpush1.bf16.msra.mxu0 0
    %443 = vmatprep.subr.bf16.mxu0 0
    %444 = vmatpush1.bf16.msra.mxu0 0
    %445 = vmatprep.subr.bf16.mxu0 0
    %446 = vmatpush1.bf16.msra.mxu0 0
    %447 = vmatprep.subr.bf16.mxu0 0
    %448 = vmatpush1.bf16.msra.mxu0 0
    %449 = vmatprep.subr.bf16.mxu0 0
    %450 = vmatpush1.bf16.msra.mxu0 0
    %451 = vmatprep.subr.bf16.mxu0 0
    %452 = vmatpush1.bf16.msra.mxu0 0
    %453 = vmatprep.subr.bf16.mxu0 0
    %454 = vmatpush1.bf16.msra.mxu0 0
    %455 = vmatprep.subr.bf16.mxu0 0
    %456 = vmatpush1.bf16.msra.mxu0 0
    %457 = vmatprep.subr.bf16.mxu0 0
    %458 = vmatpush1.bf16.msra.mxu0 0
    %459 = vmatprep.subr.bf16.mxu0 0
    %460 = vmatpush1.bf16.msra.mxu0 0
    %461 = vmatprep.subr.bf16.mxu0 0
    %462 = vmatpush1.bf16.msra.mxu0 0
    %463 = vmatprep.subr.bf16.mxu0 0
    %464 = vmatpush1.bf16.msra.mxu0 0
    %465 = vmatprep.subr.bf16.mxu0 0
    %466 = vmatpush1.bf16.msra.mxu0 0
    %467 = vmatprep.mubr.bf16.mxu0 0
    %468 = vmatmul.mubr.bf16.gmra.mrb[0].mxu0 %v430
    %v469 = vpop.f32.mrb[0].mxu0
    %v470 = vadd.f32 0.0, %v469
    %v471 = vpop.f32.mrb[0].mxu0
    %v472 = vpop.f32.mrb[0].mxu0
    %v473 = vpop.f32.mrb[0].mxu0
    %474 = vdwg.mxu0
    %475 = vst [vmem:[#allocation3] sm:$0xff] %v424
    %476 = vst [vmem:[#allocation3 + $0x8] sm:$0xff] %v470
    // Predicated region
    $region26: #{seq_attn_match.1} parent=1 // pred_check
      _
    $region27: #{seq_attn_match.1} parent=1 // pred_check_branch
      %478 = sbr.rel (0) target = $region29
    $region28: #{seq_attn_match.1} parent=1 // pred_region
      %s480 = ssub.s32 256, 256
      %481 = vsyncadd [#allocation4], %s480
      %s482 = sshll.u32 [#allocation3], 4
      %s483 = int_to_ptr.vmem [resolvable:$true] %s482
      %488 = dma.vmem_to_hbm [thread:$0]  %s483, 256, %s5, [#allocation4], 128, 128, 8
    $region29: #{seq_attn_match.1} parent=1 // pred_fallthru
      _
    // Predicated region
    $region30: #{seq_attn_match.1} parent=1 // pred_check
      _
    $region31: #{seq_attn_match.1} parent=1 // pred_check_branch
      %490 = sbr.rel (0) target = $region33
    $region32: #{seq_attn_match.1} parent=1 // pred_region
      %491 = dma.done [#allocation4], 256
    $region33: #{seq_attn_match.1} parent=1 // pred_fallthru
      _
    %492 = vsyncpa [#allocation4], 1

</llo_original>
